<compile_context>
chip_gen: v6e
topology: v6e:2x2x1
jax: 0.10.0
libtpu: 0.0.40
codegen_flags: <defaults>
</compile_context>

<pallas_src>
import functools

import jax
import jax.numpy as jnp
from jax.experimental import pallas as pl
from jax.experimental.pallas import tpu as pltpu


def _round_up(x, m):
    return ((x + m - 1) // m) * m


def _logreg_kernel(x_ref, w_ref, b_ref, o_ref):
    # x_ref: (TB, D)  w_ref: (1, D)  b_ref: (1, 1) in SMEM  o_ref: (1, TB)
    # Contract the feature axis of both operands -> (1, TB): batch on lanes.
    z = jax.lax.dot_general(
        w_ref[...], x_ref[...],
        dimension_numbers=(((1,), (1,)), ((), ())),
        preferred_element_type=jnp.float32,
    )
    z = z + b_ref[0, 0]                           # scalar bias broadcast
    o_ref[...] = jax.nn.sigmoid(z).astype(o_ref.dtype)


def _vmem_capacity_bytes():
    """Physical VMEM of the current generation; conservative fallback (v7x)."""
    try:
        return int(pltpu.get_tpu_info().vmem_capacity_bytes)
    except Exception:
        return 64 << 20


def _derive_tiling(batch, dims, itemsize):
    """Byte-based, lane-padding-aware batch tiling.

    Returns (tb, n_tiles) with tb a multiple of 128, n_tiles >= 2, and each
    (tb, D) x slab sized to a multi-MiB VMEM buffer so per-grid-step overhead
    (~0.35 us) is amortized and HBM streaming approaches roofline.
    """
    row_bytes = _round_up(dims, 128) * itemsize       # lane-padded per-row bytes
    vmem_cap = _vmem_capacity_bytes()
    # Per pipelined x buffer: ~1/5 of VMEM, clamped to [4, 16] MiB.
    #   v5e/v6e (128 MiB) -> 16 MiB/buffer;  v7x (64 MiB) -> ~12.8 MiB/buffer,
    # leaving headroom for the second buffer, output buffers, w and scratch.
    buf_budget = min(16 << 20, max(4 << 20, vmem_cap // 5))
    tb_max = max(128, ((buf_budget // row_bytes) // 128) * 128)
    b_pad128 = _round_up(max(batch, 1), 128)
    # n_tiles first (>= 2 for v7x's two TensorCores), then a balanced tb so
    # zero-padding waste stays below 128 rows per tile.
    n_tiles = max(2, pl.cdiv(b_pad128, tb_max))
    tb = _round_up(pl.cdiv(batch, n_tiles), 128)
    return tb, n_tiles


def _vmem_limit_bytes(tb, dims, x_itemsize, out_itemsize):
    """2x(x tile) + 2x(out tile) + resident w + slack, capped below VMEM."""
    d_pad = _round_up(dims, 128)
    x_buf = tb * d_pad * x_itemsize                   # one lane-padded x buffer
    o_buf = 8 * tb * out_itemsize                     # (1, tb) -> sublane-padded
    w_buf = 8 * d_pad * 4                             # resident (1, D) weight
    slack = 4 << 20                                   # Mosaic internal scratch
    need = 2 * x_buf + 2 * o_buf + w_buf + slack
    cap = int(0.9 * _vmem_capacity_bytes())
    return int(min(max(need, 32 << 20), cap))


@functools.partial(jax.jit, static_argnames=("tb",))
def logreg_forward(x, w, b, *, tb=None):
    """x: (B, D) f32, w: (1, D) f32 (nn.Linear layout), b: (1,) f32 -> (B, 1)."""
    B, D = x.shape
    itemsize = jnp.dtype(x.dtype).itemsize
    if tb is None:
        tb, n_tiles = _derive_tiling(B, D, itemsize)
    else:
        tb = _round_up(int(tb), 128)
        n_tiles = pl.cdiv(B, tb)
    b_pad = n_tiles * tb
    if b_pad != B:                                    # pad ragged batch; sliced below
        x = jnp.pad(x, ((0, b_pad - B), (0, 0)))

    b2d = jnp.reshape(b, (1, 1)).astype(jnp.float32)
    vmem_limit = _vmem_limit_bytes(tb, D, itemsize, itemsize)

    out = pl.pallas_call(
        _logreg_kernel,
        out_shape=jax.ShapeDtypeStruct((1, b_pad), x.dtype),
        grid_spec=pltpu.PrefetchScalarGridSpec(
            num_scalar_prefetch=0,
            grid=(n_tiles,),
            in_specs=[
                pl.BlockSpec((tb, D), lambda i: (i, 0)),            # stream x
                pl.BlockSpec((1, D), lambda i: (0, 0)),             # resident w
                pl.BlockSpec(memory_space=pltpu.MemorySpace.SMEM),  # scalar bias
            ],
            out_specs=pl.BlockSpec((1, tb), lambda i: (0, i)),      # lane-dense
        ),
        compiler_params=pltpu.CompilerParams(
            dimension_semantics=("parallel",),
            vmem_limit_bytes=vmem_limit,
        ),
    )(x, w, b2d)

    # (1, Bp) lane-major result -> PyTorch's (B, 1) column.
    return out[0, :B].reshape(B, 1)


if __name__ == "__main__":
    # Small demo shapes; batch deliberately not a multiple of 128 so the
    # padding path and the (>=2-tile) grid derivation are both exercised.
    batch, dims = 520, 64

    key = jax.random.PRNGKey(0)
    kx, kw, kb = jax.random.split(key, 3)

    # Deterministic params mimicking nn.Linear's default init:
    # U(-1/sqrt(dims), 1/sqrt(dims)); weight layout (out_features, in_features).
    bound = 1.0 / jnp.sqrt(jnp.float32(dims))
    x = jax.random.normal(kx, (batch, dims), dtype=jnp.float32)
    w = jax.random.uniform(kw, (1, dims), minval=-bound, maxval=bound,
                           dtype=jnp.float32)
    b = jax.random.uniform(kb, (1,), minval=-bound, maxval=bound,
                           dtype=jnp.float32)

    # Reference in plain JAX (same math as sigmoid(linear(x))).
    ref = jax.nn.sigmoid(x @ w.T + b)

    # 1) Auto-derived tiling (byte-based, >=2 balanced tiles).
    out = jax.block_until_ready(logreg_forward(x, w, b))
    assert out.shape == (batch, 1)
    assert jnp.allclose(out, ref, atol=1e-5, rtol=1e-5)

    # 2) Forced small tile: exercises a longer multi-step grid.
    out2 = jax.block_until_ready(logreg_forward(x, w, b, tb=128))
    assert out2.shape == (batch, 1)
    assert jnp.allclose(out2, ref, atol=1e-5, rtol=1e-5)

    print("KERNEL_OK")
</pallas_src>

<mosaic_0001>
module attributes {stable_mosaic.version = 11 : i64} {
  func.func @_logreg_kernel(%arg0: i32, %arg1: memref<384x64xf32, #tpu.memory_space<vmem>>, %arg2: memref<1x64xf32, #tpu.memory_space<vmem>>, %arg3: memref<1x1xf32, #tpu.memory_space<smem>>, %arg4: memref<1x384xf32, #tpu.memory_space<vmem>>) attributes {dimension_semantics = [#tpu.dimension_semantics<parallel>], iteration_bounds = array<i64: 2>, scalar_prefetch = 0 : i64, scratch_operands = 0 : i64, tpu.core_type = #tpu.core_type<tc>, window_params = [{transform_indices = @transform_0, window_bounds = array<i64: 384, 64>}, {pipeline_mode = #tpu.pipeline_mode<synchronous>, transform_indices = @transform_1, window_bounds = array<i64: 1, 64>}, {transform_indices = @transform_2, window_bounds = array<i64: 1, 1>}, {transform_indices = @transform_3, window_bounds = array<i64: 1, 384>}]} {
    %c0 = arith.constant 0 : index
    %c0_0 = arith.constant 0 : index
    %0 = vector.load %arg2[%c0, %c0_0] : memref<1x64xf32, #tpu.memory_space<vmem>>, vector<1x64xf32>
    %c0_1 = arith.constant 0 : index
    %c0_2 = arith.constant 0 : index
    %1 = vector.load %arg1[%c0_1, %c0_2] : memref<384x64xf32, #tpu.memory_space<vmem>>, vector<384x64xf32>
    %cst = arith.constant dense<0.000000e+00> : vector<1x384xf32>
    %2 = tpu.matmul %0, %1, %cst {dimension_numbers = #tpu.dot_dimension_numbers<[1], [1], [0], [0], [0, 0, 1, 0], [], []>} : vector<1x64xf32>, vector<384x64xf32>, vector<1x384xf32> -> vector<1x384xf32>
    %c0_3 = arith.constant 0 : index
    %c0_4 = arith.constant 0 : index
    %3 = memref.load %arg3[%c0_3, %c0_4] : memref<1x1xf32, #tpu.memory_space<smem>>
    %4 = vector.broadcast %3 : f32 to vector<1x384xf32>
    %5 = arith.addf %2, %4 : vector<1x384xf32>
    %6 = arith.negf %5 : vector<1x384xf32>
    %7 = math.exp %6 : vector<1x384xf32>
    %cst_5 = arith.constant 1.000000e+00 : f32
    %8 = vector.broadcast %cst_5 : f32 to vector<1x384xf32>
    %9 = arith.addf %8, %7 : vector<1x384xf32>
    %10 = arith.divf %8, %9 : vector<1x384xf32>
    %c0_6 = arith.constant 0 : index
    %c0_7 = arith.constant 0 : index
    %11 = vector.load %arg4[%c0_6, %c0_7] : memref<1x384xf32, #tpu.memory_space<vmem>>, vector<1x384xf32>
    tpu.vector_store %arg4[%c0_6, %c0_7], %10 {strides = array<i32>} : memref<1x384xf32, #tpu.memory_space<vmem>>, vector<1x384xf32>,
    return
  }
  func.func @transform_0(%arg0: i32) -> (i32, i32) {
    %c0_i32 = arith.constant 0 : i32
    %c0_i32_0 = arith.constant 0 : i32
    return %arg0, %c0_i32 : i32, i32
  }
  func.func @transform_1(%arg0: i32) -> (i32, i32) {
    %c0_i32 = arith.constant 0 : i32
    %c0_i32_0 = arith.constant 0 : i32
    %c0_i32_1 = arith.constant 0 : i32
    return %c0_i32, %c0_i32_0 : i32, i32
  }
  func.func @transform_2(%arg0: i32) -> (i32, i32) {
    %c0_i32 = arith.constant 0 : i32
    %c0_i32_0 = arith.constant 0 : i32
    %c0_i32_1 = arith.constant 0 : i32
    return %c0_i32, %c0_i32_0 : i32, i32
  }
  func.func @transform_3(%arg0: i32) -> (i32, i32) {
    %c0_i32 = arith.constant 0 : i32
    %c0_i32_0 = arith.constant 0 : i32
    return %c0_i32, %arg0 : i32, i32
  }
}

</mosaic_0001>

<llo_original>
// kernel: logreg_forward.1
$region0: #{logreg_forward.1}
  #allocation0 [shape = 'u32[]', space=smem, size = 0x4, offset = 0x4, fixed_abs, tag = 'smem constant byte address 0x4 - core index']
  #allocation1 [shape = 'u32[144,128]{1,0:T(1,128)}', space=vmem, size = 0x12000, scoped, tag = 'internal scratch']
  #allocation2 [shape = 'f32[1,1]{1,0:T(1,128)S(6)}', space=smem, size = 0x200, scoped, tag = 'scoped memory for logreg_forward.1']
  %s0 = inlined_call_operand.vmem [shape: f32[768,64], index: 0, kind: input, shape index: {}]
  %s1 = inlined_call_operand.vmem [shape: f32[1,64], index: 1, kind: input, shape index: {}]
  %s2 = inlined_call_operand.<no memory space> [shape: f32[1,1], index: 2, kind: input, shape index: {}]
  %s3 = inlined_call_operand.vmem [shape: f32[1,768], index: 3, kind: output, shape index: {}]
  %s4 = sld [smem:[#allocation0]]
  $region45: #{logreg_forward.1} parent=0
    _
  %s6 = ssub.s32 1, %s4
  %s7 = scalar_select 0, %s6, %s4
  %8 = sst [smem:[#allocation2]] %s2
  loop: start=0, step=1, limit=4
  $region2: #{logreg_forward.1} parent=0 // loop_pre_header
    _
  $region3: #{logreg_forward.1} parent=0 // loop_header
    %s10 = sphi 0, %s14
    %p11 = scmp.ge.s32.totalorder %s10, 4
    %s20 = sphi 0, %s22
    %s23 = sphi 0, %s20
    %s24 = sphi 0, %s23
    %s40 = sphi 0, %s24
    %s44 = sphi 0, %s44
    %s46 = sphi 0, %s44
    %s47 = sphi 0, %s46
    %s61 = sphi 0, %s47
    %s65 = sphi 0, %s65
    %s67 = sphi 0, %s65
    %s68 = sphi 0, %s67
    %s82 = sphi 0, %s68
    %s88 = sphi 0, %s90
    %s91 = sphi 0, %s88
    %s92 = sphi 0, %s91
    %s108 = sphi 0, %s92
  $region4: #{logreg_forward.1} parent=0 // loop_header_branch
    %13 = sbr.rel (%p11) target = $region8
  $region5: #{logreg_forward.1} parent=0 // loop_body
    %s15 = ssub.s32 %s10, 1
    %s16 = ssub.s32 %s10, 2
    %s17 = sadd.s32 %s10, 1
    %s18 = ssub.s32 %s10, %s17
    %p19 = scmp.eq.s32.totalorder %s18, 0
    %s21 = sadd.s32 %s20, 1
    %s22 = scalar_select %p19, %s20, %s21
    %p25 = pneg %p19
    %p26 = scmp.eq.s32.totalorder %s10, 1
    %p27 = por %p25, %p26
    %p28 = scmp.ne.s32.totalorder %s20, %s23
    %p29 = scmp.eq.s32.totalorder %s10, 0
    %p30 = por %p28, %p29
    %p31 = scmp.ne.s32.totalorder %s20, %s23
    %p32 = scmp.eq.s32.totalorder %s15, 1
    %p33 = por %p31, %p32
    %p34 = scmp.ne.s32.totalorder %s23, %s24
    %p35 = scmp.eq.s32.totalorder %s15, 0
    %p36 = por %p34, %p35
    %p37 = scmp.ne.s32.totalorder %s23, %s24
    %p38 = scmp.eq.s32.totalorder %s16, 1
    %p39 = por %p37, %p38
    %p41 = scmp.ne.s32.totalorder %s24, %s40
    %p42 = scmp.eq.s32.totalorder %s16, 0
    %p43 = por %p41, %p42
    %s45 = sadd.s32 %s44, 1
    %p48 = scmp.eq.s32.totalorder %s10, 1
    %p49 = scmp.ne.s32.totalorder %s44, %s46
    %p50 = scmp.eq.s32.totalorder %s10, 0
    %p51 = por %p49, %p50
    %p52 = scmp.ne.s32.totalorder %s44, %s46
    %p53 = scmp.eq.s32.totalorder %s15, 1
    %p54 = por %p52, %p53
    %p55 = scmp.ne.s32.totalorder %s46, %s47
    %p56 = scmp.eq.s32.totalorder %s15, 0
    %p57 = por %p55, %p56
    %p58 = scmp.ne.s32.totalorder %s46, %s47
    %p59 = scmp.eq.s32.totalorder %s16, 1
    %p60 = por %p58, %p59
    %p62 = scmp.ne.s32.totalorder %s47, %s61
    %p63 = scmp.eq.s32.totalorder %s16, 0
    %p64 = por %p62, %p63
    %s66 = sadd.s32 %s65, 1
    %p69 = scmp.eq.s32.totalorder %s10, 1
    %p70 = scmp.ne.s32.totalorder %s65, %s67
    %p71 = scmp.eq.s32.totalorder %s10, 0
    %p72 = por %p70, %p71
    %p73 = scmp.ne.s32.totalorder %s65, %s67
    %p74 = scmp.eq.s32.totalorder %s15, 1
    %p75 = por %p73, %p74
    %p76 = scmp.ne.s32.totalorder %s67, %s68
    %p77 = scmp.eq.s32.totalorder %s15, 0
    %p78 = por %p76, %p77
    %p79 = scmp.ne.s32.totalorder %s67, %s68
    %p80 = scmp.eq.s32.totalorder %s16, 1
    %p81 = por %p79, %p80
    %p83 = scmp.ne.s32.totalorder %s68, %s82
    %p84 = scmp.eq.s32.totalorder %s16, 0
    %p85 = por %p83, %p84
    %s86 = ssub.s32 %s10, %s17
    %p87 = scmp.eq.s32.totalorder %s86, 0
    %s89 = sadd.s32 %s88, 1
    %s90 = scalar_select %p87, %s88, %s89
    %p93 = pneg %p87
    %p94 = scmp.eq.s32.totalorder %s10, 1
    %p95 = por %p93, %p94
    %p96 = scmp.ne.s32.totalorder %s88, %s91
    %p97 = scmp.eq.s32.totalorder %s10, 0
    %p98 = por %p96, %p97
    %p99 = scmp.ne.s32.totalorder %s88, %s91
    %p100 = scmp.eq.s32.totalorder %s15, 1
    %p101 = por %p99, %p100
    %p102 = scmp.ne.s32.totalorder %s91, %s92
    %p103 = scmp.eq.s32.totalorder %s15, 0
    %p104 = por %p102, %p103
    %p105 = scmp.ne.s32.totalorder %s91, %s92
    %p106 = scmp.eq.s32.totalorder %s16, 1
    %p107 = por %p105, %p106
    %p109 = scmp.ne.s32.totalorder %s92, %s108
    %p110 = scmp.eq.s32.totalorder %s16, 0
    %p111 = por %p109, %p110
    %p112 = scmp.le.s32.totalorder 1, %s10
    %p113 = scmp.lt.s32.totalorder %s10, 3
    %p114 = pnand %p112, %p113
    %p115 = pneg %p114
    // Predicated region
    $region9: #{logreg_forward.1} parent=5 // pred_check
      _
    $region10: #{logreg_forward.1} parent=5 // pred_check_branch
      %117 = sbr.rel (%p114) target = $region12
    $region11: #{logreg_forward.1} parent=5 // pred_region
      %s118 = ssub.s32 %s10, 1
      // Predicated region
      $region13: #{logreg_forward.1} parent=11 // pred_check
        %p119 = pneg %p57
      $region14: #{logreg_forward.1} parent=11 // pred_check_branch
        %121 = sbr.rel (%p119) target = $region16
      $region15: #{logreg_forward.1} parent=11 // pred_region
        _
      $region16: #{logreg_forward.1} parent=11 // pred_fallthru
        _
      // Predicated region
      $region17: #{logreg_forward.1} parent=11 // pred_check
        %p122 = pneg %p78
      $region18: #{logreg_forward.1} parent=11 // pred_check_branch
        %124 = sbr.rel (%p122) target = $region20
      $region19: #{logreg_forward.1} parent=11 // pred_region
        _
      $region20: #{logreg_forward.1} parent=11 // pred_fallthru
        _
    $region12: #{logreg_forward.1} parent=5 // pred_fallthru
      _
    %p125 = scmp.lt.s32.totalorder %s10, 2
    // Predicated region
    $region21: #{logreg_forward.1} parent=5 // pred_check
      %p126 = pneg %p125
    $region22: #{logreg_forward.1} parent=5 // pred_check_branch
      %128 = sbr.rel (%p126) target = $region24
    $region23: #{logreg_forward.1} parent=5 // pred_region
      // Predicated region
      $region25: #{logreg_forward.1} parent=23 // pred_check
        %p129 = pneg %p30
      $region26: #{logreg_forward.1} parent=23 // pred_check_branch
        %131 = sbr.rel (%p129) target = $region28
      $region27: #{logreg_forward.1} parent=23 // pred_region
        %s132 = smul.u32 48, %s10
        %p133 = scmp.lt.s32.totalorder %s132, 95
        %s134 = scalar_select %p133, %s132, 95
        %s135 = smul.addr %s134, 8
        %s136 = scalar_lea.vmem %s0, %s135
        %s137 = smul.u32 48, %s10
      $region28: #{logreg_forward.1} parent=23 // pred_fallthru
        _
    $region24: #{logreg_forward.1} parent=5 // pred_fallthru
      _
    %p138 = scmp.le.s32.totalorder 1, %s10
    %p139 = scmp.lt.s32.totalorder %s10, 3
    %p140 = pnand %p138, %p139
    %p141 = pneg %p140
    // Predicated region
    $region29: #{logreg_forward.1} parent=5 // pred_check
      _
    $region30: #{logreg_forward.1} parent=5 // pred_check_branch
      %143 = sbr.rel (%p140) target = $region32
    $region31: #{logreg_forward.1} parent=5 // pred_region
      %s144 = ssub.s32 %s10, 1
      %s145 = smul.u32 48, %s15
      %p146 = scmp.lt.s32.totalorder %s145, 95
      %s147 = scalar_select %p146, %s145, 95
      %s148 = smul.addr %s147, 8
      %s149 = scalar_lea.vmem %s0, %s148
      %p150 = pneg %p36
      %p151 = pneg %p33
      %p152 = pneg %p57
      %p153 = pneg %p54
      %p154 = pneg %p78
      %p155 = pneg %p75
      %p156 = pneg %p104
      %p157 = pneg %p101
      %s158 = smul.u32 3, %s15
      %p159 = scmp.lt.s32.totalorder %s158, 5
      %s160 = scalar_select %p159, %s158, 5
      %s161 = scalar_lea.vmem %s3, %s160
      %s162 = smul.u32 48, %s15
      %p163 = scmp.lt.s32.totalorder %s162, 95
      %s164 = scalar_select %p163, %s162, 95
      %s165 = smul.addr %s164, 8
      %s166 = scalar_lea.vmem %s0, %s165
      %s167 = smul.u32 48, %s15
      %s168 = smul.u32 3, %s15
      %p169 = scmp.lt.s32.totalorder %s168, 5
      %s170 = scalar_select %p169, %s168, 5
      %s171 = scalar_lea.vmem %s3, %s170
      %s172 = smul.u32 3, %s15
      %v173 = vld [vmem:[%s1] sm:$0x1]
      %v174 = vld [vmem:[%s166] sm:$0xff]
      %v175 = vld [vmem:[%s166 + $0x8] sm:$0xff]
      %v176 = vld [vmem:[%s166 + $0x10] sm:$0xff]
      %v177 = vld [vmem:[%s166 + $0x18] sm:$0xff]
      %v178 = vld [vmem:[%s166 + $0x20] sm:$0xff]
      %v179 = vld [vmem:[%s166 + $0x28] sm:$0xff]
      %v180 = vld [vmem:[%s166 + $0x30] sm:$0xff]
      %v181 = vld [vmem:[%s166 + $0x38] sm:$0xff]
      %v182 = vld [vmem:[%s166 + $0x40] sm:$0xff]
      %v183 = vld [vmem:[%s166 + $0x48] sm:$0xff]
      %v184 = vld [vmem:[%s166 + $0x50] sm:$0xff]
      %v185 = vld [vmem:[%s166 + $0x58] sm:$0xff]
      %v186 = vld [vmem:[%s166 + $0x60] sm:$0xff]
      %v187 = vld [vmem:[%s166 + $0x68] sm:$0xff]
      %v188 = vld [vmem:[%s166 + $0x70] sm:$0xff]
      %v189 = vld [vmem:[%s166 + $0x78] sm:$0xff]
      %v190 = vld [vmem:[%s166 + $0x80] sm:$0xff]
      %v191 = vld [vmem:[%s166 + $0x88] sm:$0xff]
      %v192 = vld [vmem:[%s166 + $0x90] sm:$0xff]
      %v193 = vld [vmem:[%s166 + $0x98] sm:$0xff]
      %v194 = vld [vmem:[%s166 + $0xa0] sm:$0xff]
      %v195 = vld [vmem:[%s166 + $0xa8] sm:$0xff]
      %v196 = vld [vmem:[%s166 + $0xb0] sm:$0xff]
      %v197 = vld [vmem:[%s166 + $0xb8] sm:$0xff]
      %v198 = vld [vmem:[%s166 + $0xc0] sm:$0xff]
      %v199 = vld [vmem:[%s166 + $0xc8] sm:$0xff]
      %v200 = vld [vmem:[%s166 + $0xd0] sm:$0xff]
      %v201 = vld [vmem:[%s166 + $0xd8] sm:$0xff]
      %v202 = vld [vmem:[%s166 + $0xe0] sm:$0xff]
      %v203 = vld [vmem:[%s166 + $0xe8] sm:$0xff]
      %v204 = vld [vmem:[%s166 + $0xf0] sm:$0xff]
      %v205 = vld [vmem:[%s166 + $0xf8] sm:$0xff]
      %v206 = vld [vmem:[%s166 + $0x100] sm:$0xff]
      %v207 = vld [vmem:[%s166 + $0x108] sm:$0xff]
      %v208 = vld [vmem:[%s166 + $0x110] sm:$0xff]
      %v209 = vld [vmem:[%s166 + $0x118] sm:$0xff]
      %v210 = vld [vmem:[%s166 + $0x120] sm:$0xff]
      %v211 = vld [vmem:[%s166 + $0x128] sm:$0xff]
      %v212 = vld [vmem:[%s166 + $0x130] sm:$0xff]
      %v213 = vld [vmem:[%s166 + $0x138] sm:$0xff]
      %v214 = vld [vmem:[%s166 + $0x140] sm:$0xff]
      %v215 = vld [vmem:[%s166 + $0x148] sm:$0xff]
      %v216 = vld [vmem:[%s166 + $0x150] sm:$0xff]
      %v217 = vld [vmem:[%s166 + $0x158] sm:$0xff]
      %v218 = vld [vmem:[%s166 + $0x160] sm:$0xff]
      %v219 = vld [vmem:[%s166 + $0x168] sm:$0xff]
      %v220 = vld [vmem:[%s166 + $0x170] sm:$0xff]
      %v221 = vld [vmem:[%s166 + $0x178] sm:$0xff]
      %s222 = sld [smem:[#allocation2]]
      %v223 = vstv %s222
      %vm224 = vcmask 523264
      %v226 = vsel %vm224, %v173, 0
      %v229 = vsel %vm224, %v174, 0
      %v232 = vsel %vm224, %v175, 0
      %v235 = vsel %vm224, %v176, 0
      %v238 = vsel %vm224, %v177, 0
      %v241 = vsel %vm224, %v178, 0
      %v244 = vsel %vm224, %v179, 0
      %v247 = vsel %vm224, %v180, 0
      %v250 = vsel %vm224, %v181, 0
      %v253 = vsel %vm224, %v182, 0
      %v256 = vsel %vm224, %v183, 0
      %v259 = vsel %vm224, %v184, 0
      %v262 = vsel %vm224, %v185, 0
      %v265 = vsel %vm224, %v186, 0
      %v268 = vsel %vm224, %v187, 0
      %v271 = vsel %vm224, %v188, 0
      %v274 = vsel %vm224, %v189, 0
      %v277 = vsel %vm224, %v190, 0
      %v280 = vsel %vm224, %v191, 0
      %v283 = vsel %vm224, %v192, 0
      %v286 = vsel %vm224, %v193, 0
      %v289 = vsel %vm224, %v194, 0
      %v292 = vsel %vm224, %v195, 0
      %v295 = vsel %vm224, %v196, 0
      %v298 = vsel %vm224, %v197, 0
      %v301 = vsel %vm224, %v198, 0
      %v304 = vsel %vm224, %v199, 0
      %v307 = vsel %vm224, %v200, 0
      %v310 = vsel %vm224, %v201, 0
      %v313 = vsel %vm224, %v202, 0
      %v316 = vsel %vm224, %v203, 0
      %v319 = vsel %vm224, %v204, 0
      %v322 = vsel %vm224, %v205, 0
      %v325 = vsel %vm224, %v206, 0
      %v328 = vsel %vm224, %v207, 0
      %v331 = vsel %vm224, %v208, 0
      %v334 = vsel %vm224, %v209, 0
      %v337 = vsel %vm224, %v210, 0
      %v340 = vsel %vm224, %v211, 0
      %v343 = vsel %vm224, %v212, 0
      %v346 = vsel %vm224, %v213, 0
      %v349 = vsel %vm224, %v214, 0
      %v352 = vsel %vm224, %v215, 0
      %v355 = vsel %vm224, %v216, 0
      %v358 = vsel %vm224, %v217, 0
      %v361 = vsel %vm224, %v218, 0
      %v364 = vsel %vm224, %v219, 0
      %v367 = vsel %vm224, %v220, 0
      %v370 = vsel %vm224, %v221, 0
      %372 = vmatprep.subr.mxu0 0.0
      %373 = vmatpush1.xpose.msra.mxu0 %v274
      %374 = vmatprep.subr.mxu0 0.0
      %375 = vmatpush1.xpose.msra.mxu0 %v271
      %376 = vmatprep.subr.mxu0 0.0
      %377 = vmatpush1.xpose.msra.mxu0 %v268
      %378 = vmatprep.subr.mxu0 0.0
      %379 = vmatpush1.xpose.msra.mxu0 %v265
      %380 = vmatprep.subr.mxu0 0.0
      %381 = vmatpush1.xpose.msra.mxu0 %v262
      %382 = vmatprep.subr.mxu0 0.0
      %383 = vmatpush1.xpose.msra.mxu0 %v259
      %384 = vmatprep.subr.mxu0 0.0
      %385 = vmatpush1.xpose.msra.mxu0 %v256
      %386 = vmatprep.subr.mxu0 0.0
      %387 = vmatpush1.xpose.msra.mxu0 %v253
      %388 = vmatprep.subr.mxu0 0.0
      %389 = vmatpush1.xpose.msra.mxu0 %v250
      %390 = vmatprep.subr.mxu0 0.0
      %391 = vmatpush1.xpose.msra.mxu0 %v247
      %392 = vmatprep.subr.mxu0 0.0
      %393 = vmatpush1.xpose.msra.mxu0 %v244
      %394 = vmatprep.subr.mxu0 0.0
      %395 = vmatpush1.xpose.msra.mxu0 %v241
      %396 = vmatprep.subr.mxu0 0.0
      %397 = vmatpush1.xpose.msra.mxu0 %v238
      %398 = vmatprep.subr.mxu0 0.0
      %399 = vmatpush1.xpose.msra.mxu0 %v235
      %400 = vmatprep.subr.mxu0 0.0
      %401 = vmatpush1.xpose.msra.mxu0 %v232
      %402 = vmatprep.subr.mxu0 0.0
      %403 = vmatpush1.xpose.msra.mxu0 %v229
      %404 = vmatprep.subr.mxu0 0.0
      %405 = vmatpush2.xpose.msra.mxu0 %v322
      %406 = vmatprep.subr.mxu0 0.0
      %407 = vmatpush2.xpose.msra.mxu0 %v319
      %408 = vmatprep.subr.mxu0 0.0
      %409 = vmatpush2.xpose.msra.mxu0 %v316
      %410 = vmatprep.subr.mxu0 0.0
      %411 = vmatpush2.xpose.msra.mxu0 %v313
      %412 = vmatprep.subr.mxu0 0.0
      %413 = vmatpush2.xpose.msra.mxu0 %v310
      %414 = vmatprep.subr.mxu0 0.0
      %415 = vmatpush2.xpose.msra.mxu0 %v307
      %416 = vmatprep.subr.mxu0 0.0
      %417 = vmatpush2.xpose.msra.mxu0 %v304
      %418 = vmatprep.subr.mxu0 0.0
      %419 = vmatpush2.xpose.msra.mxu0 %v301
      %420 = vmatprep.subr.mxu0 0.0
      %421 = vmatpush2.xpose.msra.mxu0 %v298
      %422 = vmatprep.subr.mxu0 0.0
      %423 = vmatpush2.xpose.msra.mxu0 %v295
      %424 = vmatprep.subr.mxu0 0.0
      %425 = vmatpush2.xpose.msra.mxu0 %v292
      %426 = vmatprep.subr.mxu0 0.0
      %427 = vmatpush2.xpose.msra.mxu0 %v289
      %428 = vmatprep.subr.mxu0 0.0
      %429 = vmatpush2.xpose.msra.mxu0 %v286
      %430 = vmatprep.subr.mxu0 0.0
      %431 = vmatpush2.xpose.msra.mxu0 %v283
      %432 = vmatprep.subr.mxu0 0.0
      %433 = vmatpush2.xpose.msra.mxu0 %v280
      %434 = vmatprep.subr.mxu0 0.0
      %435 = vmatpush2.xpose.msra.mxu0 %v277
      %436 = vmatprep.mubr.f32.mxu0 0.0
      %437 = vmatmul.mubr.f32.gmra.mxu0 %v226
      %v438 = vpop.f32.mrf.mxu0
      %v439 = vadd.f32 %v223, %v438
      %v440 = vpop.f32.mrf.mxu0
      %v441 = vadd.f32 %v223, %v440
      %442 = vdwg.mxu0
      %443 = vmatprep.subr.mxu0 0.0
      %444 = vmatpush1.xpose.msra.mxu0 %v370
      %445 = vmatprep.subr.mxu0 0.0
      %446 = vmatpush1.xpose.msra.mxu0 %v367
      %447 = vmatprep.subr.mxu0 0.0
      %448 = vmatpush1.xpose.msra.mxu0 %v364
      %449 = vmatprep.subr.mxu0 0.0
      %450 = vmatpush1.xpose.msra.mxu0 %v361
      %451 = vmatprep.subr.mxu0 0.0
      %452 = vmatpush1.xpose.msra.mxu0 %v358
      %453 = vmatprep.subr.mxu0 0.0
      %454 = vmatpush1.xpose.msra.mxu0 %v355
      %455 = vmatprep.subr.mxu0 0.0
      %456 = vmatpush1.xpose.msra.mxu0 %v352
      %457 = vmatprep.subr.mxu0 0.0
      %458 = vmatpush1.xpose.msra.mxu0 %v349
      %459 = vmatprep.subr.mxu0 0.0
      %460 = vmatpush1.xpose.msra.mxu0 %v346
      %461 = vmatprep.subr.mxu0 0.0
      %462 = vmatpush1.xpose.msra.mxu0 %v343
      %463 = vmatprep.subr.mxu0 0.0
      %464 = vmatpush1.xpose.msra.mxu0 %v340
      %465 = vmatprep.subr.mxu0 0.0
      %466 = vmatpush1.xpose.msra.mxu0 %v337
      %467 = vmatprep.subr.mxu0 0.0
      %468 = vmatpush1.xpose.msra.mxu0 %v334
      %469 = vmatprep.subr.mxu0 0.0
      %470 = vmatpush1.xpose.msra.mxu0 %v331
      %471 = vmatprep.subr.mxu0 0.0
      %472 = vmatpush1.xpose.msra.mxu0 %v328
      %473 = vmatprep.subr.mxu0 0.0
      %474 = vmatpush1.xpose.msra.mxu0 %v325
      %475 = vmatprep.subr.mxu0 0.0
      %476 = vmatpush2.xpose.msra.mxu0 0.0
      %477 = vmatprep.subr.mxu0 0.0
      %478 = vmatpush2.xpose.msra.mxu0 0.0
      %479 = vmatprep.subr.mxu0 0.0
      %480 = vmatpush2.xpose.msra.mxu0 0.0
      %481 = vmatprep.subr.mxu0 0.0
      %482 = vmatpush2.xpose.msra.mxu0 0.0
      %483 = vmatprep.subr.mxu0 0.0
      %484 = vmatpush2.xpose.msra.mxu0 0.0
      %485 = vmatprep.subr.mxu0 0.0
      %486 = vmatpush2.xpose.msra.mxu0 0.0
      %487 = vmatprep.subr.mxu0 0.0
      %488 = vmatpush2.xpose.msra.mxu0 0.0
      %489 = vmatprep.subr.mxu0 0.0
      %490 = vmatpush2.xpose.msra.mxu0 0.0
      %491 = vmatprep.subr.mxu0 0.0
      %492 = vmatpush2.xpose.msra.mxu0 0.0
      %493 = vmatprep.subr.mxu0 0.0
      %494 = vmatpush2.xpose.msra.mxu0 0.0
      %495 = vmatprep.subr.mxu0 0.0
      %496 = vmatpush2.xpose.msra.mxu0 0.0
      %497 = vmatprep.subr.mxu0 0.0
      %498 = vmatpush2.xpose.msra.mxu0 0.0
      %499 = vmatprep.subr.mxu0 0.0
      %500 = vmatpush2.xpose.msra.mxu0 0.0
      %501 = vmatprep.subr.mxu0 0.0
      %502 = vmatpush2.xpose.msra.mxu0 0.0
      %503 = vmatprep.subr.mxu0 0.0
      %504 = vmatpush2.xpose.msra.mxu0 0.0
      %505 = vmatprep.subr.mxu0 0.0
      %506 = vmatpush2.xpose.msra.mxu0 0.0
      %507 = vmatprep.mubr.f32.mxu0 0.0
      %508 = vmatmul.mubr.f32.gmra.mxu0 %v226
      %v509 = vpop.f32.mrf.mxu0
      %v510 = vadd.f32 %v223, %v509
      %v511 = vpop.f32.mrf.mxu0
      %512 = vdwg.mxu0
      %v513 = vxor.u32 %v439, 2147483648
      %v514 = vxor.u32 %v441, 2147483648
      %v515 = vxor.u32 %v510, 2147483648
      %v516 = vmul.f32 %v513, 1.442695
      %v517 = vpow.pop %v516
      %v518 = vmul.f32 %v514, 1.442695
      %v519 = vpow.pop %v518
      %v520 = vmul.f32 %v515, 1.442695
      %v521 = vpow.pop %v520
      %v522 = vadd.f32 %v517, 1.0
      %v523 = vadd.f32 %v519, 1.0
      %v524 = vadd.f32 %v521, 1.0
      %v525 = vrcp.pop %v522
      %v526 = vmul.f32 1.0, %v525
      %v527 = vrcp.pop %v523
      %v528 = vmul.f32 1.0, %v527
      %v529 = vrcp.pop %v524
      %v530 = vmul.f32 1.0, %v529
      %v534 = vcombine.low %v526, %v528
      %v536 = vunpack.c.l.s4 1966171168
      %v537 = vunpack.c.0.s8 %v536
      %v538 = vlaneseq
      %v539 = vshrl.u32 %v538, 7
      %v540 = vsub.s32 %v537, %v539
      %v541 = vrot.slane %v534, %v540
      %v543 = vunpack.c.l.s4 1966171168
      %v544 = vunpack.c.0.s8 %v543
      %v545 = vlaneseq
      %v546 = vshrl.u32 %v545, 7
      %v547 = vsub.s32 %v544, %v546
      %v548 = vrot.slane %v530, %v547
      %v549 = vcombine.low %v541, %v548
      %v551 = vunpack.c.l.s4 1966171168
      %v552 = vunpack.c.0.s8 %v551
      %v553 = vlaneseq
      %v554 = vshrl.u32 %v553, 7
      %v555 = vsub.s32 %v552, %v554
      %v556 = vrot.slane %v549, %v555
      %v558 = vlaneseq
      %vm559 = vcmp.ge.s32.totalorder %v558, 0
      %vm560 = vcmp.lt.s32.totalorder %v558, 384
      %vm561 = vmand %vm559, %vm560
      %562 = vst.msk [vmem:[%s171] sm:$0x7] %vm561, %v556
      %s563 = smul.u32 3, %s15
      %p564 = scmp.lt.s32.totalorder %s563, 5
      %s565 = scalar_select %p564, %s563, 5
      %s566 = scalar_lea.vmem %s3, %s565
      // Predicated region
      $region33: #{logreg_forward.1} parent=31 // pred_check
        %p567 = pneg %p101
      $region34: #{logreg_forward.1} parent=31 // pred_check_branch
        %569 = sbr.rel (%p567) target = $region36
      $region35: #{logreg_forward.1} parent=31 // pred_region
        %s570 = smul.u32 3, %s15
      $region36: #{logreg_forward.1} parent=31 // pred_fallthru
        _
    $region32: #{logreg_forward.1} parent=5 // pred_fallthru
      _
    %p571 = scmp.le.s32.totalorder 2, %s10
    // Predicated region
    $region37: #{logreg_forward.1} parent=5 // pred_check
      %p572 = pneg %p571
    $region38: #{logreg_forward.1} parent=5 // pred_check_branch
      %574 = sbr.rel (%p572) target = $region40
    $region39: #{logreg_forward.1} parent=5 // pred_region
      %s575 = ssub.s32 %s10, 2
      // Predicated region
      $region41: #{logreg_forward.1} parent=39 // pred_check
        %p576 = pneg %p107
      $region42: #{logreg_forward.1} parent=39 // pred_check_branch
        %578 = sbr.rel (%p576) target = $region44
      $region43: #{logreg_forward.1} parent=39 // pred_region
        %s579 = smul.u32 3, %s16
        %p580 = scmp.lt.s32.totalorder %s579, 5
        %s581 = scalar_select %p580, %s579, 5
        %s582 = scalar_lea.vmem %s3, %s581
      $region44: #{logreg_forward.1} parent=39 // pred_fallthru
        _
    $region40: #{logreg_forward.1} parent=5 // pred_fallthru
      _
  $region6: #{logreg_forward.1} parent=0 // loop_footer
    %s14 = sadd.s32 1, %s10
  $region7: #{logreg_forward.1} parent=0 // loop_footer_branch
    %9 = sbr.rel target = $region3
  $region8: #{logreg_forward.1} parent=0 // loop_exit
    _

</llo_original>
